<compile_context>
chip_gen: v6e
topology: v6e:2x2x1
jax: 0.10.0
libtpu: 0.0.40
codegen_flags: <defaults>
</compile_context>

<pallas_src>
import functools

import jax
import jax.numpy as jnp
from jax.experimental import pallas as pl
from jax.experimental.pallas import tpu as pltpu


_LANE = 128


# ----------------------------- LayerNorm kernel -----------------------------

def _layer_norm_kernel(x_ref, alpha_ref, beta_ref, o_ref, *, eps):
    """LayerNorm over the N (sequence) axis of one batch; block = (1, N, D)."""
    x = x_ref[...].astype(jnp.float32)                      # (1, N, D)
    mean = jnp.mean(x, axis=1, keepdims=True)               # (1, 1, D)
    diff = x - mean
    var = jnp.mean(diff * diff, axis=1, keepdims=True)      # biased (unbiased=False)
    y = diff * jax.lax.rsqrt(var + eps)
    y = y * alpha_ref[...].astype(jnp.float32) + beta_ref[...].astype(jnp.float32)
    o_ref[...] = y.astype(o_ref.dtype)


def layer_norm(x, alpha, beta, *, eps=1e-5):
    B, N, D = x.shape
    alpha = alpha[:N, :D]
    beta = beta[:N, :D]
    return pl.pallas_call(
        functools.partial(_layer_norm_kernel, eps=eps),
        out_shape=jax.ShapeDtypeStruct((B, N, D), x.dtype),
        grid=(B,),
        in_specs=[
            pl.BlockSpec((1, N, D), lambda b: (b, 0, 0)),
            pl.BlockSpec((N, D), lambda b: (0, 0)),
            pl.BlockSpec((N, D), lambda b: (0, 0)),
        ],
        out_specs=pl.BlockSpec((1, N, D), lambda b: (b, 0, 0)),
        compiler_params=pltpu.CompilerParams(
            dimension_semantics=("parallel",)),
    )(x, alpha, beta)


# ----------------------- Residual + dropout kernels --------------------------

def _residual_kernel(x_ref, sub_ref, o_ref):
    """out = x + sub (no dropout). Cast of sub fused into the kernel."""
    o_ref[...] = (x_ref[...].astype(jnp.float32)
                  + sub_ref[...].astype(jnp.float32)).astype(o_ref.dtype)


def _residual_dropout_kernel(x_ref, sub_ref, u_ref, o_ref, *, p_drop):
    """out = x + sub * m, where m in {0, 1/(1-p)} selected by uniform u."""
    x = x_ref[...].astype(jnp.float32)
    sub = sub_ref[...].astype(jnp.float32)
    keep = u_ref[...] >= jnp.float32(p_drop)                 # drop iff u < p
    scale = jnp.float32(1.0 / (1.0 - p_drop))
    m = jnp.where(keep, scale, jnp.float32(0.0))             # {0, scale} selector
    o_ref[...] = (x + sub * m).astype(o_ref.dtype)


def _pick_layout(total, rows0, cols0):
    """2-D slab with a lane-dense last dim (multiple of 128) when possible."""
    if cols0 % _LANE == 0:
        return rows0, cols0
    for lane in (2048, 1024, 512, 256, 128):
        if total % lane == 0:
            return total // lane, lane
    return rows0, cols0  # fallback: single full-array block handles this case


def _pick_tile_rows(rows, cols, n_streams, vmem_budget=12 * 1024 * 1024):
    """Largest row tile (multiple of 8, divides rows) fitting the VMEM budget.

    Budget assumes n_streams f32-wide streams, each double-buffered; sized so
    the default scoped VMEM limit is respected on v5e/v6e/v7x alike.
    """
    if cols % _LANE != 0 or rows % 8 != 0:
        return rows                      # block must equal full array dims
    cap = vmem_budget // (2 * n_streams * cols * 4)
    cap = min(max(cap - cap % 8, 8), 1024)
    if rows <= cap:
        return rows
    for t in range(cap, 7, -8):
        if rows % t == 0:
            return t
    return rows


def residual_dropout(x, sub_out, *, p_drop=0.1, rng_key=None):
    """out = x + dropout(sub_out); elementwise, lane-dense, row-tiled."""
    B, N, D = x.shape
    total = B * N * D
    rows, cols = _pick_layout(total, B * N, D)
    x2 = x.reshape(rows, cols)
    s2 = sub_out.reshape(rows, cols)          # native dtype; cast fused in kernel

    if p_drop >= 1.0:
        return x                              # dropout(p=1) zeroes the sublayer
    if p_drop <= 0.0:
        inputs = (x2, s2)
        kernel = _residual_kernel
        n_streams = 3                         # x, sub, out
    else:
        assert rng_key is not None, "rng_key required when p_drop > 0"
        u = jax.random.uniform(rng_key, (rows, cols), dtype=jnp.float32)
        inputs = (x2, s2, u)
        kernel = functools.partial(_residual_dropout_kernel, p_drop=p_drop)
        n_streams = 4                         # x, sub, mask, out

    tile_r = _pick_tile_rows(rows, cols, n_streams)
    grid = (rows // tile_r,)
    row_spec = pl.BlockSpec((tile_r, cols), lambda i: (i, 0))

    out = pl.pallas_call(
        kernel,
        out_shape=jax.ShapeDtypeStruct((rows, cols), x.dtype),
        grid=grid,
        in_specs=[row_spec] * len(inputs),
        out_specs=row_spec,
        compiler_params=pltpu.CompilerParams(
            dimension_semantics=("parallel",)),
    )(*inputs)
    return out.reshape(B, N, D)


# --------------------------------- AddAndNorm --------------------------------

def add_and_norm(x, sublayer, alpha, beta, *, eps=1e-5, p_drop=0.1, rng_key=None):
    """Pallas implementation of AddAndNorm.forward (training-mode dropout)."""
    x_norm = layer_norm(x, alpha, beta, eps=eps)
    sub_out = sublayer(x_norm)                # arbitrary callable: plain-JAX glue
    return residual_dropout(x, sub_out, p_drop=p_drop, rng_key=rng_key)


# ----------------------------------- Test -------------------------------------

if __name__ == "__main__":
    key = jax.random.PRNGKey(0)
    B, N, D = 2, 8, 32                        # BATCH_SZ, N, D_MODEL
    EPS, P_DROP = 1e-5, 0.1

    k_x, k_w, k_b, k_drop = jax.random.split(key, 4)
    X = jax.random.normal(k_x, (B, N, D), dtype=jnp.float32)
    alpha = jnp.ones((N, D), jnp.float32)     # LayerNorm params (default init)
    beta = jnp.zeros((N, D), jnp.float32)

    # Deterministic example sublayer: small linear map D_MODEL -> D_MODEL.
    W = jax.random.normal(k_w, (D, D), dtype=jnp.float32) * 0.05
    b = jax.random.normal(k_b, (D,), dtype=jnp.float32) * 0.01
    sublayer = lambda t: jnp.einsum("bnd,de->bne", t, W) + b

    # Reference LayerNorm (mean/var over dim 1, biased var), pure JAX.
    mean = X.mean(axis=1, keepdims=True)
    var = X.var(axis=1, keepdims=True)        # ddof=0 == unbiased=False
    Xn_ref = (X - mean) / jnp.sqrt(var + EPS) * alpha + beta

    # Check the Pallas LayerNorm kernel on its own.
    Xn_pallas = layer_norm(X, alpha, beta, eps=EPS)
    jax.block_until_ready(Xn_pallas)
    assert jnp.allclose(Xn_pallas, Xn_ref, atol=1e-4, rtol=1e-4)

    # p_drop = 0 path must reduce to X + sublayer(norm(X)).
    out0 = add_and_norm(X, sublayer, alpha, beta, eps=EPS, p_drop=0.0,
                        rng_key=k_drop)
    jax.block_until_ready(out0)
    ref0 = X + sublayer(Xn_pallas)
    assert jnp.allclose(out0, ref0, atol=1e-5, rtol=1e-5)

    # Training-mode dropout path (p_drop = 0.1), deterministic key.
    out = add_and_norm(X, sublayer, alpha, beta, eps=EPS, p_drop=P_DROP,
                       rng_key=k_drop)
    jax.block_until_ready(out)
    assert out.shape == (B, N, D)

    # Every output element is either X (dropped) or X + scaled sublayer (kept).
    sub = sublayer(Xn_pallas)
    kept_val = X + sub * (1.0 / (1.0 - P_DROP))
    is_dropped = jnp.isclose(out, X, atol=1e-5)
    is_kept = jnp.isclose(out, kept_val, atol=1e-5)
    assert bool(jnp.all(is_dropped | is_kept))

    print("KERNEL_OK")
</pallas_src>

<mosaic_0001>
module attributes {stable_mosaic.version = 11 : i64} {
  func.func @_layer_norm_kernel(%arg0: i32, %arg1: memref<1x8x32xf32, #tpu.memory_space<vmem>>, %arg2: memref<8x32xf32, #tpu.memory_space<vmem>>, %arg3: memref<8x32xf32, #tpu.memory_space<vmem>>, %arg4: memref<1x8x32xf32, #tpu.memory_space<vmem>>) attributes {dimension_semantics = [#tpu.dimension_semantics<parallel>], iteration_bounds = array<i64: 2>, scalar_prefetch = 0 : i64, scratch_operands = 0 : i64, tpu.core_type = #tpu.core_type<tc>, window_params = [{transform_indices = @transform_0, window_bounds = array<i64: 1, 8, 32>}, {pipeline_mode = #tpu.pipeline_mode<synchronous>, transform_indices = @transform_1, window_bounds = array<i64: 8, 32>}, {pipeline_mode = #tpu.pipeline_mode<synchronous>, transform_indices = @transform_2, window_bounds = array<i64: 8, 32>}, {transform_indices = @transform_3, window_bounds = array<i64: 1, 8, 32>}]} {
    %c0 = arith.constant 0 : index
    %c0_0 = arith.constant 0 : index
    %c0_1 = arith.constant 0 : index
    %0 = vector.load %arg1[%c0, %c0_0, %c0_1] : memref<1x8x32xf32, #tpu.memory_space<vmem>>, vector<1x8x32xf32>
    %cst = arith.constant dense<0.000000e+00> : vector<1x32xf32>
    %1 = vector.multi_reduction <add>, %0, %cst [1] : vector<1x8x32xf32> to vector<1x32xf32>
    %2 = vector.shape_cast %1 : vector<1x32xf32> to vector<1x1x32xf32>
    %cst_2 = arith.constant 8.000000e+00 : f32
    %3 = vector.broadcast %cst_2 : f32 to vector<1x1x32xf32>
    %4 = arith.divf %2, %3 : vector<1x1x32xf32>
    %5 = vector.broadcast %4 : vector<1x1x32xf32> to vector<1x8x32xf32>
    %6 = arith.subf %0, %5 : vector<1x8x32xf32>
    %7 = arith.mulf %6, %6 : vector<1x8x32xf32>
    %cst_3 = arith.constant dense<0.000000e+00> : vector<1x32xf32>
    %8 = vector.multi_reduction <add>, %7, %cst_3 [1] : vector<1x8x32xf32> to vector<1x32xf32>
    %9 = vector.shape_cast %8 : vector<1x32xf32> to vector<1x1x32xf32>
    %cst_4 = arith.constant 8.000000e+00 : f32
    %10 = vector.broadcast %cst_4 : f32 to vector<1x1x32xf32>
    %11 = arith.divf %9, %10 : vector<1x1x32xf32>
    %cst_5 = arith.constant 9.99999974E-6 : f32
    %12 = vector.broadcast %cst_5 : f32 to vector<1x1x32xf32>
    %13 = arith.addf %11, %12 : vector<1x1x32xf32>
    %14 = math.rsqrt %13 : vector<1x1x32xf32>
    %15 = vector.broadcast %14 : vector<1x1x32xf32> to vector<1x8x32xf32>
    %16 = arith.mulf %6, %15 : vector<1x8x32xf32>
    %c0_6 = arith.constant 0 : index
    %c0_7 = arith.constant 0 : index
    %17 = vector.load %arg2[%c0_6, %c0_7] : memref<8x32xf32, #tpu.memory_space<vmem>>, vector<8x32xf32>
    %18 = vector.shape_cast %17 : vector<8x32xf32> to vector<1x8x32xf32>
    %19 = arith.mulf %16, %18 : vector<1x8x32xf32>
    %c0_8 = arith.constant 0 : index
    %c0_9 = arith.constant 0 : index
    %20 = vector.load %arg3[%c0_8, %c0_9] : memref<8x32xf32, #tpu.memory_space<vmem>>, vector<8x32xf32>
    %21 = vector.shape_cast %20 : vector<8x32xf32> to vector<1x8x32xf32>
    %22 = arith.addf %19, %21 : vector<1x8x32xf32>
    %c0_10 = arith.constant 0 : index
    %c0_11 = arith.constant 0 : index
    %c0_12 = arith.constant 0 : index
    %23 = vector.load %arg4[%c0_10, %c0_11, %c0_12] : memref<1x8x32xf32, #tpu.memory_space<vmem>>, vector<1x8x32xf32>
    tpu.vector_store %arg4[%c0_10, %c0_11, %c0_12], %22 {strides = array<i32>} : memref<1x8x32xf32, #tpu.memory_space<vmem>>, vector<1x8x32xf32>,
    return
  }
  func.func @transform_0(%arg0: i32) -> (i32, i32, i32) {
    %c0_i32 = arith.constant 0 : i32
    %c0_i32_0 = arith.constant 0 : i32
    %c0_i32_1 = arith.constant 0 : i32
    return %arg0, %c0_i32, %c0_i32_0 : i32, i32, i32
  }
  func.func @transform_1(%arg0: i32) -> (i32, i32) {
    %c0_i32 = arith.constant 0 : i32
    %c0_i32_0 = arith.constant 0 : i32
    %c0_i32_1 = arith.constant 0 : i32
    return %c0_i32, %c0_i32_0 : i32, i32
  }
  func.func @transform_2(%arg0: i32) -> (i32, i32) {
    %c0_i32 = arith.constant 0 : i32
    %c0_i32_0 = arith.constant 0 : i32
    %c0_i32_1 = arith.constant 0 : i32
    return %c0_i32, %c0_i32_0 : i32, i32
  }
  func.func @transform_3(%arg0: i32) -> (i32, i32, i32) {
    %c0_i32 = arith.constant 0 : i32
    %c0_i32_0 = arith.constant 0 : i32
    %c0_i32_1 = arith.constant 0 : i32
    return %arg0, %c0_i32, %c0_i32_0 : i32, i32, i32
  }
}

</mosaic_0001>

<llo_original>
// kernel: tpu_custom_call.1
$region0: #{tpu_custom_call.1}
  #allocation0 [shape = 'u32[]', space=smem, size = 0x4, offset = 0x4, fixed_abs, tag = 'smem constant byte address 0x4 - core index']
  #allocation1 [shape = 'u32[144,128]{1,0:T(1,128)}', space=vmem, size = 0x12000, scoped, tag = 'internal scratch']
  %s0 = inlined_call_operand.hbm [shape: f32[2,8,32], index: 0, kind: input, shape index: {}]
  %s1 = inlined_call_operand.hbm [shape: f32[8,32], index: 1, kind: input, shape index: {}]
  %s2 = inlined_call_operand.hbm [shape: f32[8,32], index: 2, kind: input, shape index: {}]
  %s3 = inlined_call_operand.hbm [shape: f32[2,8,32], index: 3, kind: output, shape index: {}]
  %s4 = sld [smem:[#allocation0]]
  $region57: #{tpu_custom_call.1} parent=0
    _
  %s6 = ssub.s32 1, %s4
  %s7 = scalar_select 0, %s6, %s4
  $region1: #{tpu_custom_call.1} parent=0
    #allocation2 [shape = 'u8[8192]{0}', space=vmem, size = 0x2000, scoped, tag = 'input window, operand 0']
    #allocation3 [shape = 's32[2]{0}', space=sflag, size = 0x8, scoped, tag = 'scoped memory for tpu_custom_call.1']
    #allocation4 [shape = 's32[2]{0}', space=sflag, size = 0x8, scoped, tag = 'scoped memory for tpu_custom_call.1']
    #allocation5 [shape = 'u8[4096]{0}', space=vmem, size = 0x1000, scoped, tag = 'input window, operand 1, single buffered']
    #allocation6 [shape = 's32[1]{0}', space=sflag, size = 0x4, scoped, tag = 'scoped memory for tpu_custom_call.1']
    #allocation7 [shape = 'u8[4096]{0}', space=vmem, size = 0x1000, scoped, tag = 'input window, operand 2, single buffered']
    #allocation8 [shape = 'u8[8192]{0}', space=vmem, size = 0x2000, scoped, tag = 'output window, operand 0']
    %8 = vsyncpa [#allocation3], 0
    %s9 = scalar_lea.sflag [#allocation3], 1
    %10 = vsyncpa %s9, 0
    %11 = vsyncpa [#allocation6], 0
    %12 = vsyncpa [#allocation4], 0
    %s13 = scalar_lea.sflag [#allocation4], 1
    %14 = vsyncpa %s13, 0
    loop: start=0, step=1, limit=4
    $region2: #{tpu_custom_call.1} parent=1 // loop_pre_header
      _
    $region3: #{tpu_custom_call.1} parent=1 // loop_header
      %s16 = sphi 0, %s20
      %p17 = scmp.ge.s32.totalorder %s16, 4
      %s26 = sphi 0, %s28
      %s29 = sphi 0, %s26
      %s30 = sphi 0, %s29
      %s46 = sphi 0, %s30
      %s50 = sphi 0, %s50
      %s52 = sphi 0, %s50
      %s53 = sphi 0, %s52
      %s67 = sphi 0, %s53
      %s71 = sphi 0, %s71
      %s73 = sphi 0, %s71
      %s74 = sphi 0, %s73
      %s88 = sphi 0, %s74
      %s94 = sphi 0, %s96
      %s97 = sphi 0, %s94
      %s98 = sphi 0, %s97
      %s114 = sphi 0, %s98
    $region4: #{tpu_custom_call.1} parent=1 // loop_header_branch
      %19 = sbr.rel (%p17) target = $region8
    $region5: #{tpu_custom_call.1} parent=1 // loop_body
      %s21 = ssub.s32 %s16, 1
      %s22 = ssub.s32 %s16, 2
      %s23 = sadd.s32 %s16, 1
      %s24 = ssub.s32 %s16, %s23
      %p25 = scmp.eq.s32.totalorder %s24, 0
      %s27 = sadd.s32 %s26, 1
      %s28 = scalar_select %p25, %s26, %s27
      %p31 = pneg %p25
      %p32 = scmp.eq.s32.totalorder %s16, 1
      %p33 = por %p31, %p32
      %p34 = scmp.ne.s32.totalorder %s26, %s29
      %p35 = scmp.eq.s32.totalorder %s16, 0
      %p36 = por %p34, %p35
      %p37 = scmp.ne.s32.totalorder %s26, %s29
      %p38 = scmp.eq.s32.totalorder %s21, 1
      %p39 = por %p37, %p38
      %p40 = scmp.ne.s32.totalorder %s29, %s30
      %p41 = scmp.eq.s32.totalorder %s21, 0
      %p42 = por %p40, %p41
      %p43 = scmp.ne.s32.totalorder %s29, %s30
      %p44 = scmp.eq.s32.totalorder %s22, 1
      %p45 = por %p43, %p44
      %p47 = scmp.ne.s32.totalorder %s30, %s46
      %p48 = scmp.eq.s32.totalorder %s22, 0
      %p49 = por %p47, %p48
      %s51 = sadd.s32 %s50, 1
      %p54 = scmp.eq.s32.totalorder %s16, 1
      %p55 = scmp.ne.s32.totalorder %s50, %s52
      %p56 = scmp.eq.s32.totalorder %s16, 0
      %p57 = por %p55, %p56
      %p58 = scmp.ne.s32.totalorder %s50, %s52
      %p59 = scmp.eq.s32.totalorder %s21, 1
      %p60 = por %p58, %p59
      %p61 = scmp.ne.s32.totalorder %s52, %s53
      %p62 = scmp.eq.s32.totalorder %s21, 0
      %p63 = por %p61, %p62
      %p64 = scmp.ne.s32.totalorder %s52, %s53
      %p65 = scmp.eq.s32.totalorder %s22, 1
      %p66 = por %p64, %p65
      %p68 = scmp.ne.s32.totalorder %s53, %s67
      %p69 = scmp.eq.s32.totalorder %s22, 0
      %p70 = por %p68, %p69
      %s72 = sadd.s32 %s71, 1
      %p75 = scmp.eq.s32.totalorder %s16, 1
      %p76 = scmp.ne.s32.totalorder %s71, %s73
      %p77 = scmp.eq.s32.totalorder %s16, 0
      %p78 = por %p76, %p77
      %p79 = scmp.ne.s32.totalorder %s71, %s73
      %p80 = scmp.eq.s32.totalorder %s21, 1
      %p81 = por %p79, %p80
      %p82 = scmp.ne.s32.totalorder %s73, %s74
      %p83 = scmp.eq.s32.totalorder %s21, 0
      %p84 = por %p82, %p83
      %p85 = scmp.ne.s32.totalorder %s73, %s74
      %p86 = scmp.eq.s32.totalorder %s22, 1
      %p87 = por %p85, %p86
      %p89 = scmp.ne.s32.totalorder %s74, %s88
      %p90 = scmp.eq.s32.totalorder %s22, 0
      %p91 = por %p89, %p90
      %s92 = ssub.s32 %s16, %s23
      %p93 = scmp.eq.s32.totalorder %s92, 0
      %s95 = sadd.s32 %s94, 1
      %s96 = scalar_select %p93, %s94, %s95
      %p99 = pneg %p93
      %p100 = scmp.eq.s32.totalorder %s16, 1
      %p101 = por %p99, %p100
      %p102 = scmp.ne.s32.totalorder %s94, %s97
      %p103 = scmp.eq.s32.totalorder %s16, 0
      %p104 = por %p102, %p103
      %p105 = scmp.ne.s32.totalorder %s94, %s97
      %p106 = scmp.eq.s32.totalorder %s21, 1
      %p107 = por %p105, %p106
      %p108 = scmp.ne.s32.totalorder %s97, %s98
      %p109 = scmp.eq.s32.totalorder %s21, 0
      %p110 = por %p108, %p109
      %p111 = scmp.ne.s32.totalorder %s97, %s98
      %p112 = scmp.eq.s32.totalorder %s22, 1
      %p113 = por %p111, %p112
      %p115 = scmp.ne.s32.totalorder %s98, %s114
      %p116 = scmp.eq.s32.totalorder %s22, 0
      %p117 = por %p115, %p116
      %p118 = scmp.le.s32.totalorder 1, %s16
      %p119 = scmp.lt.s32.totalorder %s16, 3
      %p120 = pnand %p118, %p119
      %p121 = pneg %p120
      // Predicated region
      $region9: #{tpu_custom_call.1} parent=5 // pred_check
        _
      $region10: #{tpu_custom_call.1} parent=5 // pred_check_branch
        %123 = sbr.rel (%p120) target = $region12
      $region11: #{tpu_custom_call.1} parent=5 // pred_region
        %s124 = ssub.s32 %s16, 1
        // Predicated region
        $region13: #{tpu_custom_call.1} parent=11 // pred_check
          %p125 = pneg %p63
        $region14: #{tpu_custom_call.1} parent=11 // pred_check_branch
          %127 = sbr.rel (%p125) target = $region16
        $region15: #{tpu_custom_call.1} parent=11 // pred_region
          %s129 = ssub.s32 128, 128
          %130 = vsyncadd [#allocation6], %s129
          %s132 = sshll.u32 [#allocation5], 4
          %s133 = int_to_ptr.vmem [resolvable:$true] %s132
          %135 = dma.hbm_to_vmem [thread:$0]  %s1, 128, %s133, [#allocation6]
        $region16: #{tpu_custom_call.1} parent=11 // pred_fallthru
          _
        // Predicated region
        $region17: #{tpu_custom_call.1} parent=11 // pred_check
          %p136 = pneg %p84
        $region18: #{tpu_custom_call.1} parent=11 // pred_check_branch
          %138 = sbr.rel (%p136) target = $region20
        $region19: #{tpu_custom_call.1} parent=11 // pred_region
          %s140 = ssub.s32 128, 128
          %141 = vsyncadd [#allocation6], %s140
          %s143 = sshll.u32 [#allocation7], 4
          %s144 = int_to_ptr.vmem [resolvable:$true] %s143
          %146 = dma.hbm_to_vmem [thread:$0]  %s2, 128, %s144, [#allocation6]
        $region20: #{tpu_custom_call.1} parent=11 // pred_fallthru
          _
      $region12: #{tpu_custom_call.1} parent=5 // pred_fallthru
        _
      %p147 = scmp.lt.s32.totalorder %s16, 2
      // Predicated region
      $region21: #{tpu_custom_call.1} parent=5 // pred_check
        %p148 = pneg %p147
      $region22: #{tpu_custom_call.1} parent=5 // pred_check_branch
        %150 = sbr.rel (%p148) target = $region24
      $region23: #{tpu_custom_call.1} parent=5 // pred_region
        // Predicated region
        $region25: #{tpu_custom_call.1} parent=23 // pred_check
          %p151 = pneg %p36
        $region26: #{tpu_custom_call.1} parent=23 // pred_check_branch
          %153 = sbr.rel (%p151) target = $region28
        $region27: #{tpu_custom_call.1} parent=23 // pred_region
          %s154 = sand.u32 %s26, 1
          %s155 = scalar_lea.sflag [#allocation3], %s154
          %s156 = sand.u32 %s26, 1
          %s157 = smul.addr %s156, 8
          %s158 = scalar_lea.vmem [#allocation2], %s157
          %s160 = ssub.s32 128, 128
          %161 = vsyncadd %s155, %s160
          %s162 = smul.addr %s16, 128
          %s163 = scalar_lea.hbm %s0, %s162
          %s165 = sshll.u32 %s158, 4
          %s166 = int_to_ptr.vmem [resolvable:$true] %s165
          %168 = dma.hbm_to_vmem [thread:$0]  %s163, 128, %s166, %s155
        $region28: #{tpu_custom_call.1} parent=23 // pred_fallthru
          _
      $region24: #{tpu_custom_call.1} parent=5 // pred_fallthru
        _
      %p169 = scmp.le.s32.totalorder 1, %s16
      %p170 = scmp.lt.s32.totalorder %s16, 3
      %p171 = pnand %p169, %p170
      %p172 = pneg %p171
      // Predicated region
      $region29: #{tpu_custom_call.1} parent=5 // pred_check
        _
      $region30: #{tpu_custom_call.1} parent=5 // pred_check_branch
        %174 = sbr.rel (%p171) target = $region32
      $region31: #{tpu_custom_call.1} parent=5 // pred_region
        %s175 = ssub.s32 %s16, 1
        %s176 = sand.u32 %s29, 1
        %s177 = scalar_lea.sflag [#allocation3], %s176
        %s178 = sand.u32 %s29, 1
        %s179 = smul.addr %s178, 8
        %s180 = scalar_lea.vmem [#allocation2], %s179
        // Predicated region
        $region33: #{tpu_custom_call.1} parent=31 // pred_check
          %p181 = pneg %p42
        $region34: #{tpu_custom_call.1} parent=31 // pred_check_branch
          %183 = sbr.rel (%p181) target = $region36
        $region35: #{tpu_custom_call.1} parent=31 // pred_region
          %184 = dma.done %s177, 128
        $region36: #{tpu_custom_call.1} parent=31 // pred_fallthru
          _
        // Predicated region
        $region37: #{tpu_custom_call.1} parent=31 // pred_check
          %p185 = pneg %p63
        $region38: #{tpu_custom_call.1} parent=31 // pred_check_branch
          %187 = sbr.rel (%p185) target = $region40
        $region39: #{tpu_custom_call.1} parent=31 // pred_region
          %188 = dma.done [#allocation6], 128
        $region40: #{tpu_custom_call.1} parent=31 // pred_fallthru
          _
        // Predicated region
        $region41: #{tpu_custom_call.1} parent=31 // pred_check
          %p189 = pneg %p84
        $region42: #{tpu_custom_call.1} parent=31 // pred_check_branch
          %191 = sbr.rel (%p189) target = $region44
        $region43: #{tpu_custom_call.1} parent=31 // pred_region
          %192 = dma.done [#allocation6], 128
        $region44: #{tpu_custom_call.1} parent=31 // pred_fallthru
          _
        %s193 = sand.u32 %s29, 1
        %s194 = scalar_lea.sflag [#allocation3], %s193
        %s195 = sand.u32 %s29, 1
        %s196 = smul.addr %s195, 8
        %s197 = scalar_lea.vmem [#allocation2], %s196
        %p198 = pneg %p42
        %p199 = pneg %p39
        %p200 = pneg %p63
        %p201 = pneg %p60
        %p202 = pneg %p84
        %p203 = pneg %p81
        %p204 = pneg %p110
        %p205 = pneg %p107
        %s206 = sand.u32 %s97, 1
        %s207 = scalar_lea.sflag [#allocation4], %s206
        %s208 = sand.u32 %s97, 1
        %s209 = smul.addr %s208, 8
        %s210 = scalar_lea.vmem [#allocation8], %s209
        %v211 = vld [vmem:[%s180] sm:$0xff]
        %vm212 = vcmask 261120
        %v213 = vsel %vm212, %v211, 0.0
        %v214 = vrot.slane %v213, 4
        %v215 = vadd.f32 %v213, %v214
        %v216 = vrot.slane %v215, 2
        %v217 = vadd.f32 %v215, %v216
        %v218 = vrot.slane %v217, 1
        %v219 = vadd.f32 %v217, %v218
        %v220 = vrcp.pop 8.0
        %v221 = vmul.f32 %v219, %v220
        %v222 = vsub.f32 %v211, %v221
        %v223 = vmul.f32 %v222, %v222
        %v224 = vsel %vm212, %v223, 0.0
        %v225 = vrot.slane %v224, 4
        %v226 = vadd.f32 %v224, %v225
        %v227 = vrot.slane %v226, 2
        %v228 = vadd.f32 %v226, %v227
        %v229 = vrot.slane %v228, 1
        %v230 = vadd.f32 %v228, %v229
        %v231 = vmul.f32 %v230, %v220
        %v232 = vadd.f32 %v231, 1e-05
        %v233 = vrsqrt.pop %v232
        %v234 = vmul.f32 %v222, %v233
        %v235 = vld [vmem:[#allocation5] sm:$0xff]
        %v236 = vmul.f32 %v234, %v235
        %v237 = vld [vmem:[#allocation7] sm:$0xff]
        %v238 = vadd.f32 %v236, %v237
        %239 = vst.msk [vmem:[%s210] sm:$0xff] %vm212, %v238
        %s240 = sand.u32 %s97, 1
        %s241 = scalar_lea.sflag [#allocation4], %s240
        %s242 = sand.u32 %s97, 1
        %s243 = smul.addr %s242, 8
        %s244 = scalar_lea.vmem [#allocation8], %s243
        // Predicated region
        $region45: #{tpu_custom_call.1} parent=31 // pred_check
          %p245 = pneg %p107
        $region46: #{tpu_custom_call.1} parent=31 // pred_check_branch
          %247 = sbr.rel (%p245) target = $region48
        $region47: #{tpu_custom_call.1} parent=31 // pred_region
          %s249 = ssub.s32 128, 128
          %250 = vsyncadd %s241, %s249
          %s251 = smul.addr %s21, 128
          %s252 = scalar_lea.hbm %s3, %s251
          %s254 = sshll.u32 %s244, 4
          %s255 = int_to_ptr.vmem [resolvable:$true] %s254
          %257 = dma.vmem_to_hbm [thread:$0]  %s255, 128, %s252, %s241
        $region48: #{tpu_custom_call.1} parent=31 // pred_fallthru
          _
      $region32: #{tpu_custom_call.1} parent=5 // pred_fallthru
        _
      %p258 = scmp.le.s32.totalorder 2, %s16
      // Predicated region
      $region49: #{tpu_custom_call.1} parent=5 // pred_check
        %p259 = pneg %p258
      $region50: #{tpu_custom_call.1} parent=5 // pred_check_branch
        %261 = sbr.rel (%p259) target = $region52
      $region51: #{tpu_custom_call.1} parent=5 // pred_region
        %s262 = ssub.s32 %s16, 2
        // Predicated region
        $region53: #{tpu_custom_call.1} parent=51 // pred_check
          %p263 = pneg %p113
        $region54: #{tpu_custom_call.1} parent=51 // pred_check_branch
          %265 = sbr.rel (%p263) target = $region56
        $region55: #{tpu_custom_call.1} parent=51 // pred_region
          %s266 = sand.u32 %s98, 1
          %s267 = scalar_lea.sflag [#allocation4], %s266
          %s268 = sand.u32 %s98, 1
          %s269 = smul.addr %s268, 8
          %s270 = scalar_lea.vmem [#allocation8], %s269
          %271 = dma.done %s267, 128
        $region56: #{tpu_custom_call.1} parent=51 // pred_fallthru
          _
      $region52: #{tpu_custom_call.1} parent=5 // pred_fallthru
        _
    $region6: #{tpu_custom_call.1} parent=1 // loop_footer
      %s20 = sadd.s32 1, %s16
    $region7: #{tpu_custom_call.1} parent=1 // loop_footer_branch
      %15 = sbr.rel target = $region3
    $region8: #{tpu_custom_call.1} parent=1 // loop_exit
      _
    %272 = vsyncpa [#allocation3], 1
    %s273 = scalar_lea.sflag [#allocation3], 1
    %274 = vsyncpa %s273, 1
    %275 = vsyncpa [#allocation6], 1
    %276 = vsyncpa [#allocation4], 1
    %s277 = scalar_lea.sflag [#allocation4], 1
    %278 = vsyncpa %s277, 1

</llo_original>
